<compile_context>
chip_gen: v7x
topology: tpu7x:2x2x1
jax: 0.10.0
libtpu: 0.0.40
codegen_flags: <defaults>
</compile_context>

<pallas_src>
import jax
import jax.numpy as jnp
from jax.experimental import pallas as pl
from jax.experimental.pallas import tpu as pltpu  # noqa: F401  (TPU backend)


_LANE = 128          # vreg lane width
_SUBLANE = 8         # vreg sublane count


def _flatten_lane_dense(x, width):
    """Flatten `x` to a [rows, width] slab with rows a multiple of 8.

    `width` is a multiple of 128 so stores are unmasked / lane-dense.
    Zero-pads the tail; the wrapper slices the padding back off.
    """
    n = x.size
    tile = width * _SUBLANE
    padded = -(-n // tile) * tile
    flat = x.reshape(-1)
    if padded != n:
        flat = jnp.pad(flat, (0, padded - n))
    return flat.reshape(padded // width, width)


def _pallas_copy(arrays):
    """Copy one or more arrays through a SINGLE fused Pallas call.

    Each array is presented to the kernel as a lane-dense 2D slab that lives
    entirely in VMEM (grid-less), so the kernel is a handful of full-width
    vld/vst pairs with no pipeline ramp or masked partial stores.
    """
    arrays = tuple(arrays)
    flats = []
    for a in arrays:
        # Big tensors get a wide slab (large multiple of 128); tiny ones 128.
        width = 1024 if a.size >= 1024 * _SUBLANE else _LANE
        flats.append(_flatten_lane_dense(a, width))

    n_arr = len(flats)

    def kernel(*refs):
        # refs = (*in_refs, *out_refs); pure identity copy of each slab.
        for i in range(n_arr):
            refs[n_arr + i][...] = refs[i][...]

    # TODO(synk): for very large LSTM outputs (>~4 MiB per slab) add a
    # row-tiled grid so double-buffered blocks stay under v7x's 32 MiB
    # scoped-VMEM default; unnecessary at these shapes.
    outs = pl.pallas_call(
        kernel,
        out_shape=tuple(jax.ShapeDtypeStruct(f.shape, f.dtype) for f in flats),
    )(*flats)
    if not isinstance(outs, (list, tuple)):
        outs = (outs,)

    return tuple(
        o.reshape(-1)[: a.size].reshape(a.shape) for o, a in zip(outs, arrays)
    )


def extract_lstm_output(x, extract_out=True, materialize=False):
    """JAX equivalent of ExtractLSTMOutput.forward.

    x is (out, hidden) with hidden = (h, c), mirroring torch.nn.LSTM.

    Default (materialize=False): pure tuple routing — returns the selected
    member with no copy and no HBM round trip (the optimal implementation).

    materialize=True: route the selection through one fused, lane-dense
    Pallas copy kernel (fresh output buffers; single launch even for (h, c)).
    """
    out, hidden = x
    if extract_out:
        if not materialize:
            return out
        return _pallas_copy((out,))[0]
    else:
        if not materialize:
            return hidden
        h, c = hidden
        return _pallas_copy((h, c))


if __name__ == "__main__":
    key = jax.random.PRNGKey(0)
    k_out, k_h, k_c = jax.random.split(key, 3)

    batch, seq, hidden_dim, num_layers = 2, 8, 32, 1

    # Synthetic LSTM outputs (deterministic PRNG, no external data).
    lstm_out = jax.random.normal(k_out, (batch, seq, hidden_dim), dtype=jnp.float32)
    h_n = jax.random.normal(k_h, (num_layers, batch, hidden_dim), dtype=jnp.float32)
    c_n = jax.random.normal(k_c, (num_layers, batch, hidden_dim), dtype=jnp.float32)

    x = (lstm_out, (h_n, c_n))

    # --- Default (optimal) path: free tuple routing, no kernel needed. ---
    y_fast = extract_lstm_output(x, extract_out=True)
    assert y_fast.shape == lstm_out.shape and jnp.array_equal(y_fast, lstm_out)
    h_fast = extract_lstm_output(x, extract_out=False)
    assert jnp.array_equal(h_fast[0], h_n) and jnp.array_equal(h_fast[1], c_n)

    # --- Pallas path: single fused, lane-dense, grid-less copy kernel. ---
    y = extract_lstm_output(x, extract_out=True, materialize=True)
    y = jax.block_until_ready(y)
    assert y.shape == lstm_out.shape and jnp.allclose(y, lstm_out)

    h_out = extract_lstm_output(x, extract_out=False, materialize=True)
    h_out = jax.block_until_ready(h_out)
    assert h_out[0].shape == h_n.shape and h_out[1].shape == c_n.shape
    assert jnp.allclose(h_out[0], h_n) and jnp.allclose(h_out[1], c_n)

    print("KERNEL_OK")
</pallas_src>

<mosaic_0001>
module attributes {stable_mosaic.version = 11 : i64} {
  func.func @kernel(%arg0: memref<8x128xf32, #tpu.memory_space<vmem>>, %arg1: memref<8x128xf32, #tpu.memory_space<vmem>>) attributes {dimension_semantics = [], scalar_prefetch = 0 : i64, scratch_operands = 0 : i64, tpu.core_type = #tpu.core_type<tc>} {
    %c0 = arith.constant 0 : index
    %c0_0 = arith.constant 0 : index
    %0 = vector.load %arg0[%c0, %c0_0] : memref<8x128xf32, #tpu.memory_space<vmem>>, vector<8x128xf32>
    %c0_1 = arith.constant 0 : index
    %c0_2 = arith.constant 0 : index
    %1 = vector.load %arg1[%c0_1, %c0_2] : memref<8x128xf32, #tpu.memory_space<vmem>>, vector<8x128xf32>
    tpu.vector_store %arg1[%c0_1, %c0_2], %0 {strides = array<i32>} : memref<8x128xf32, #tpu.memory_space<vmem>>, vector<8x128xf32>,
    return
  }
}

</mosaic_0001>

<llo_original>
// kernel: tpu_custom_call.1
$region0: #{tpu_custom_call.1}
  #allocation0 [shape = 'u32[]', space=smem, size = 0x4, offset = 0x4, fixed_abs, tag = 'smem constant byte address 0x4 - core index']
  #allocation1 [shape = 'u32[144,128]{1,0:T(1,128)}', space=vmem, size = 0x12000, scoped, tag = 'internal scratch']
  %s0 = inlined_call_operand.hbm [shape: f32[8,128], index: 0, kind: input, shape index: {}]
  %s1 = inlined_call_operand.hbm [shape: f32[8,128], index: 1, kind: output, shape index: {}]
  %s2 = sld [smem:[#allocation0]]
  $region18: #{tpu_custom_call.1} parent=0
    _
  %s4 = ssub.s32 1, %s2
  %s5 = scalar_select 0, %s4, %s2
  $region1: #{tpu_custom_call.1} parent=0
    #allocation2 [shape = 'u8[4096]{0}', space=vmem, size = 0x1000, scoped, tag = 'input window, operand 0, single buffered']
    #allocation3 [shape = 's32[1]{0}', space=sflag, size = 0x4, scoped, tag = 'scoped memory for tpu_custom_call.1']
    #allocation4 [shape = 's32[1]{0}', space=sflag, size = 0x4, scoped, tag = 'scoped memory for tpu_custom_call.1']
    #allocation5 [shape = 'u8[4096]{0}', space=vmem, size = 0x1000, scoped, tag = 'output window, operand 0, single buffered']
    %6 = vsyncpa [#allocation3], 0
    %7 = vsyncpa [#allocation4], 0
    // Predicated region
    $region2: #{tpu_custom_call.1} parent=1 // pred_check
      _
    $region3: #{tpu_custom_call.1} parent=1 // pred_check_branch
      %9 = sbr.rel (0) target = $region5
    $region4: #{tpu_custom_call.1} parent=1 // pred_region
      %s11 = ssub.s32 128, 128
      %12 = vsyncadd [#allocation3], %s11
      %s14 = sshll.u32 [#allocation2], 4
      %s15 = int_to_ptr.vmem [resolvable:$true] %s14
      %17 = dma.hbm_to_vmem [thread:$0]  %s0, 128, %s15, [#allocation3]
    $region5: #{tpu_custom_call.1} parent=1 // pred_fallthru
      _
    // Predicated region
    $region6: #{tpu_custom_call.1} parent=1 // pred_check
      _
    $region7: #{tpu_custom_call.1} parent=1 // pred_check_branch
      %19 = sbr.rel (0) target = $region9
    $region8: #{tpu_custom_call.1} parent=1 // pred_region
      %20 = dma.done [#allocation3], 128
    $region9: #{tpu_custom_call.1} parent=1 // pred_fallthru
      _
    %v21 = vld [vmem:[#allocation2] sm:$0xff]
    %22 = vst [vmem:[#allocation5] sm:$0xff] %v21
    // Predicated region
    $region10: #{tpu_custom_call.1} parent=1 // pred_check
      _
    $region11: #{tpu_custom_call.1} parent=1 // pred_check_branch
      %24 = sbr.rel (0) target = $region13
    $region12: #{tpu_custom_call.1} parent=1 // pred_region
      %s26 = ssub.s32 128, 128
      %27 = vsyncadd [#allocation4], %s26
      %s29 = sshll.u32 [#allocation5], 4
      %s30 = int_to_ptr.vmem [resolvable:$true] %s29
      %32 = dma.vmem_to_hbm [thread:$0]  %s30, 128, %s1, [#allocation4]
    $region13: #{tpu_custom_call.1} parent=1 // pred_fallthru
      _
    // Predicated region
    $region14: #{tpu_custom_call.1} parent=1 // pred_check
      _
    $region15: #{tpu_custom_call.1} parent=1 // pred_check_branch
      %34 = sbr.rel (0) target = $region17
    $region16: #{tpu_custom_call.1} parent=1 // pred_region
      %35 = dma.done [#allocation4], 128
    $region17: #{tpu_custom_call.1} parent=1 // pred_fallthru
      _
    %36 = vsyncpa [#allocation3], 1
    %37 = vsyncpa [#allocation4], 1

</llo_original>
